<compile_context>
chip_gen: v5e
topology: v5e:2x2
jax: 0.10.0
libtpu: 0.0.40
codegen_flags: <defaults>
</compile_context>

<pallas_src>
import functools

import jax
import jax.numpy as jnp
from jax.experimental import pallas as pl
from jax.experimental.pallas import tpu as pltpu

_BN_EPS = 1e-5


def _round_up(a, b):
    return (a + b - 1) // b * b


def _nonlinearity_fn(name):
    if name == "sine":
        return lambda x: jnp.sin(30.0 * x)
    if name == "relu":
        return lambda x: jnp.maximum(x, 0.0)
    if name == "lrelu":
        return lambda x: jnp.where(x >= 0, x, 0.01 * x)
    if name == "sigmoid":
        return jax.nn.sigmoid
    if name == "tanh":
        return jnp.tanh
    if name == "selu":
        return jax.nn.selu
    if name == "softplus":
        return jax.nn.softplus
    if name == "elu":
        return jax.nn.elu
    if name == "identity":
        return lambda x: x
    raise ValueError(f"unknown nonlinearity: {name}")


# ------------------------------ Pallas kernels ------------------------------ #

def _stats_kernel(p_ref, w_ref, s1_ref, s2_ref):
    """Pass 1 (BN): (Cout,K)@(K,Mt) matmul, emit per-tile partial sum / sumsq only."""
    conv = jnp.dot(w_ref[0], p_ref[0], preferred_element_type=jnp.float32)
    s1_ref[0, 0] = jnp.sum(conv, axis=1, keepdims=True)
    s2_ref[0, 0] = jnp.sum(conv * conv, axis=1, keepdims=True)


def _conv_bn_act_kernel(p_ref, w_ref, aff_ref, o_ref, *, act):
    """Pass 2 (BN): recompute matmul, one FMA (folded scale/shift) + activation."""
    conv = jnp.dot(w_ref[0], p_ref[0], preferred_element_type=jnp.float32)
    scale = aff_ref[0]   # (Cout, 1)
    shift = aff_ref[1]   # (Cout, 1)
    o_ref[0] = act(conv * scale + shift).astype(o_ref.dtype)


def _conv_bias_act_kernel(p_ref, w_ref, b_ref, o_ref, *, act):
    """No-BatchNorm path: matmul + bias + activation in one pass."""
    conv = jnp.dot(w_ref[0], p_ref[0], preferred_element_type=jnp.float32)
    o_ref[0] = act(conv + b_ref[0]).astype(o_ref.dtype)


# --------------------------------- wrapper ---------------------------------- #

def conv_transpose2d_block(x, weight, bias, gamma, beta, *, stride, padding,
                           batch_norm, nonlinearity, m_tile=2048):
    """x: (N, Cin, H, W); weight: (Cin, Cout, KH, KW) (PyTorch ConvTranspose2d layout)."""
    N, Cin, H, W = x.shape
    Cin_w, Cout, KH, KW = weight.shape
    assert Cin_w == Cin
    s = int(stride)
    output_padding = 1 if s == 2 else 0   # matches the module spec
    Ho = (H - 1) * s - 2 * padding + KH + output_padding
    Wo = (W - 1) * s - 2 * padding + KW + output_padding
    pad_h = KH - 1 - padding
    pad_w = KW - 1 - padding
    assert pad_h >= 0 and pad_w >= 0, "padding > kernel_size - 1 not supported"
    # TODO(synk): general fallback when kernel_size % stride != 0 (unequal polyphase
    # tap counts); every config this module uses (e.g. k=4, s=2) satisfies it.
    assert KH % s == 0 and KW % s == 0

    act = _nonlinearity_fn(nonlinearity)

    Th, Tw = KH // s, KW // s
    G = s * s
    Ksub = Th * Tw * Cin
    Hp_max = -(-Ho // s)
    Wp_max = -(-Wo // s)
    Mp = N * Hp_max * Wp_max

    # M tiling (lane axis): multiple of 128, sized to keep padding waste small.
    num_tiles = max(1, -(-Mp // m_tile))
    mt = _round_up(-(-Mp // num_tiles), 128)
    Mp_pad = mt * num_tiles

    # ----- polyphase patch / weight construction (pure layout work, in XLA) -----
    # flipped kernel: wflip[kh, kw, ci, co] = weight[ci, co, KH-1-kh, KW-1-kw]
    wflip = jnp.transpose(weight[:, :, ::-1, ::-1], (2, 3, 0, 1)).astype(jnp.float32)

    base_h = [-((pad_h - ph) // s) for ph in range(s)]
    base_w = [-((pad_w - pw) // s) for pw in range(s)]
    res_h = [(pad_h - ph) % s for ph in range(s)]
    res_w = [(pad_w - pw) % s for pw in range(s)]
    pre_h = max(0, -min(base_h))
    pre_w = max(0, -min(base_w))
    post_h = max(0, (Hp_max - 1) + (Th - 1) + max(base_h) - (H - 1))
    post_w = max(0, (Wp_max - 1) + (Tw - 1) + max(base_w) - (W - 1))

    # channel-major, zero-padded input (bf16 operands for the matmul stream)
    xc = jnp.transpose(x, (1, 0, 2, 3)).astype(jnp.bfloat16)       # (Cin, N, H, W)
    xp = jnp.pad(xc, ((0, 0), (0, 0), (pre_h, post_h), (pre_w, post_w)))

    patch_groups, weight_groups = [], []
    for ph in range(s):
        for pw in range(s):
            taps = []
            for th in range(Th):
                a = pre_h + base_h[ph] + th
                for tw in range(Tw):
                    b = pre_w + base_w[pw] + tw
                    taps.append(xp[:, :, a:a + Hp_max, b:b + Wp_max])  # (Cin,N,Hp,Wp)
            pg = jnp.stack(taps, axis=0).reshape(Ksub, Mp)
            if batch_norm:
                # Zero columns outside the real output grid so they contribute
                # exactly 0 to the BN statistics (count excludes them).
                Hp_g = -(-(Ho - ph) // s)
                Wp_g = -(-(Wo - pw) // s)
                valid = ((jnp.arange(Hp_max) < Hp_g)[:, None]
                         & (jnp.arange(Wp_max) < Wp_g)[None, :])
                valid = jnp.broadcast_to(valid[None], (N, Hp_max, Wp_max)).reshape(1, Mp)
                pg = jnp.where(valid, pg, 0)
            pg = jnp.pad(pg, ((0, 0), (0, Mp_pad - Mp)))
            patch_groups.append(pg)

            wg = wflip[res_h[ph]::s, res_w[pw]::s, :, :]            # (Th,Tw,Cin,Cout)
            wg = jnp.transpose(wg, (3, 0, 1, 2)).reshape(Cout, Ksub)
            weight_groups.append(wg)

    patches = jnp.stack(patch_groups, axis=0).astype(jnp.bfloat16)   # (G, K, Mp_pad)
    wmat = jnp.stack(weight_groups, axis=0).astype(jnp.bfloat16)     # (G, Cout, K)

    # ------------------------------ pallas calls ------------------------------ #
    grid = (G, num_tiles)
    cparams = pltpu.CompilerParams(
        dimension_semantics=("parallel", "parallel"),
        vmem_limit_bytes=32 * 1024 * 1024)

    patches_spec = pl.BlockSpec((1, Ksub, mt), lambda g, t: (g, 0, t))
    w_spec = pl.BlockSpec((1, Cout, Ksub), lambda g, t: (g, 0, 0))
    out_spec = pl.BlockSpec((1, Cout, mt), lambda g, t: (g, 0, t))

    matmul_flops = 2 * G * Cout * Ksub * Mp_pad
    patch_bytes = patches.size * 2 + wmat.size * 2
    out_bytes = G * Cout * Mp_pad * 4

    if batch_norm:
        # Pass 1: per-(group, tile) partial sums for BN statistics (no conv writeback).
        psum, psqs = pl.pallas_call(
            _stats_kernel,
            grid=grid,
            in_specs=[patches_spec, w_spec],
            out_specs=(
                pl.BlockSpec((1, 1, Cout, 1), lambda g, t: (g, t, 0, 0)),
                pl.BlockSpec((1, 1, Cout, 1), lambda g, t: (g, t, 0, 0)),
            ),
            out_shape=(
                jax.ShapeDtypeStruct((G, num_tiles, Cout, 1), jnp.float32),
                jax.ShapeDtypeStruct((G, num_tiles, Cout, 1), jnp.float32),
            ),
            compiler_params=cparams,
            cost_estimate=pl.CostEstimate(
                flops=matmul_flops, transcendentals=0, bytes_accessed=patch_bytes),
        )(patches, wmat)

        # Tiny cross-tile reduction + scale/shift folding (O(Cout) XLA work).
        count = float(N * Ho * Wo)
        total = jnp.sum(psum, axis=(0, 1))[:, 0]
        total_sq = jnp.sum(psqs, axis=(0, 1))[:, 0]
        mean = total / count
        var = jnp.maximum(total_sq / count - mean * mean, 0.0)   # biased, BN training
        scale = gamma.astype(jnp.float32) * jax.lax.rsqrt(var + _BN_EPS)
        shift = beta.astype(jnp.float32) - mean * scale          # bias cancels under BN
        affine = jnp.stack([scale, shift], axis=0).reshape(2, Cout, 1)

        # Pass 2: recompute the cheap matmul, apply folded BN + activation.
        y = pl.pallas_call(
            functools.partial(_conv_bn_act_kernel, act=act),
            grid=grid,
            in_specs=[patches_spec, w_spec,
                      pl.BlockSpec((2, Cout, 1), lambda g, t: (0, 0, 0))],
            out_specs=out_spec,
            out_shape=jax.ShapeDtypeStruct((G, Cout, Mp_pad), jnp.float32),
            compiler_params=cparams,
            cost_estimate=pl.CostEstimate(
                flops=matmul_flops, transcendentals=0,
                bytes_accessed=patch_bytes + out_bytes),
        )(patches, wmat, affine)
    else:
        bias_arr = bias.astype(jnp.float32).reshape(1, Cout, 1)
        y = pl.pallas_call(
            functools.partial(_conv_bias_act_kernel, act=act),
            grid=grid,
            in_specs=[patches_spec, w_spec,
                      pl.BlockSpec((1, Cout, 1), lambda g, t: (0, 0, 0))],
            out_specs=out_spec,
            out_shape=jax.ShapeDtypeStruct((G, Cout, Mp_pad), jnp.float32),
            compiler_params=cparams,
            cost_estimate=pl.CostEstimate(
                flops=matmul_flops, transcendentals=0,
                bytes_accessed=patch_bytes + out_bytes),
        )(patches, wmat, bias_arr)

    # ---- interleave the s*s polyphase outputs back into (N, Cout, Ho, Wo) ----
    # Invalid (over-hang) polyphase rows/cols land at output indices >= Ho / Wo,
    # so a single transpose + slice trims them (no strided scatters needed).
    y5 = y[:, :, :Mp].reshape(s, s, Cout, N, Hp_max, Wp_max)
    out = jnp.transpose(y5, (3, 2, 4, 0, 5, 1)).reshape(
        N, Cout, Hp_max * s, Wp_max * s)
    return out[:, :, :Ho, :Wo]


# -------------------------------- reference --------------------------------- #

def _reference(x, weight, bias, gamma, beta, *, stride, padding, batch_norm, nonlinearity):
    """Pure-JAX reference (lhs-dilated conv); matmul operands in bf16 like the kernel."""
    N, Cin, H, W = x.shape
    _, Cout, KH, KW = weight.shape
    output_padding = 1 if stride == 2 else 0
    pad_h = KH - 1 - padding
    pad_w = KW - 1 - padding
    wf = jnp.transpose(weight[:, :, ::-1, ::-1], (2, 3, 0, 1))   # (KH,KW,Cin,Cout)
    x_nhwc = jnp.transpose(x, (0, 2, 3, 1))
    conv = jax.lax.conv_general_dilated(
        x_nhwc.astype(jnp.bfloat16), wf.astype(jnp.bfloat16),
        window_strides=(1, 1),
        padding=[(pad_h, pad_h + output_padding), (pad_w, pad_w + output_padding)],
        lhs_dilation=(stride, stride),
        dimension_numbers=("NHWC", "HWIO", "NHWC"),
        preferred_element_type=jnp.float32,
    )
    conv = conv + bias.reshape(1, 1, 1, Cout)
    if batch_norm:
        mean = jnp.mean(conv, axis=(0, 1, 2), keepdims=True)
        var = jnp.mean((conv - mean) ** 2, axis=(0, 1, 2), keepdims=True)
        conv = (conv - mean) * jax.lax.rsqrt(var + _BN_EPS)
        conv = conv * gamma.reshape(1, 1, 1, Cout) + beta.reshape(1, 1, 1, Cout)
    conv = _nonlinearity_fn(nonlinearity)(conv)
    return jnp.transpose(conv, (0, 3, 1, 2))


if __name__ == "__main__":
    # Module config: ConvTranspose2dBlock(4, 8, kernel_size=4, stride=2, padding=1, ...)
    in_channels, out_channels = 4, 8
    kernel_size, stride, padding = 4, 2, 1

    key = jax.random.PRNGKey(0)
    kx, kw, kb = jax.random.split(key, 3)
    x = jax.random.normal(kx, (2, in_channels, 16, 16), dtype=jnp.float32)
    weight = 0.1 * jax.random.normal(
        kw, (in_channels, out_channels, kernel_size, kernel_size), dtype=jnp.float32)
    bias = 0.1 * jax.random.normal(kb, (out_channels,), dtype=jnp.float32)
    gamma = jnp.ones((out_channels,), jnp.float32)   # BatchNorm2d weight init
    beta = jnp.zeros((out_channels,), jnp.float32)   # BatchNorm2d bias init

    for batch_norm, nonlinearity in [(True, "relu"), (False, "tanh")]:
        out = conv_transpose2d_block(
            x, weight, bias, gamma, beta,
            stride=stride, padding=padding,
            batch_norm=batch_norm, nonlinearity=nonlinearity)
        out = jax.block_until_ready(out)
        ref = _reference(
            x, weight, bias, gamma, beta,
            stride=stride, padding=padding,
            batch_norm=batch_norm, nonlinearity=nonlinearity)
        assert out.shape == (2, out_channels, 33, 33), out.shape
        err = float(jnp.abs(out - ref).max())
        assert jnp.allclose(out, ref, atol=2e-3, rtol=2e-3), (batch_norm, nonlinearity, err)

    print("KERNEL_OK")
</pallas_src>

<mosaic_0001>
module attributes {stable_mosaic.version = 11 : i64} {
  func.func @_stats_kernel(%arg0: i32, %arg1: i32, %arg2: memref<1x16x640xbf16, #tpu.memory_space<vmem>>, %arg3: memref<1x8x16xbf16, #tpu.memory_space<vmem>>, %arg4: memref<1x1x8x1xf32, #tpu.memory_space<vmem>>, %arg5: memref<1x1x8x1xf32, #tpu.memory_space<vmem>>) attributes {dimension_semantics = [#tpu.dimension_semantics<parallel>, #tpu.dimension_semantics<parallel>], iteration_bounds = array<i64: 4, 1>, scalar_prefetch = 0 : i64, scratch_operands = 0 : i64, tpu.core_type = #tpu.core_type<tc>, window_params = [{transform_indices = @transform_0, window_bounds = array<i64: 1, 16, 640>}, {transform_indices = @transform_1, window_bounds = array<i64: 1, 8, 16>}, {transform_indices = @transform_2, window_bounds = array<i64: 1, 1, 8, 1>}, {transform_indices = @transform_3, window_bounds = array<i64: 1, 1, 8, 1>}]} {
    %c0 = arith.constant 0 : index
    %c0_0 = arith.constant 0 : index
    %c0_1 = arith.constant 0 : index
    %0 = vector.load %arg3[%c0, %c0_0, %c0_1] : memref<1x8x16xbf16, #tpu.memory_space<vmem>>, vector<1x8x16xbf16>
    %1 = vector.shape_cast %0 : vector<1x8x16xbf16> to vector<8x16xbf16>
    %c0_2 = arith.constant 0 : index
    %c0_3 = arith.constant 0 : index
    %c0_4 = arith.constant 0 : index
    %2 = vector.load %arg2[%c0_2, %c0_3, %c0_4] : memref<1x16x640xbf16, #tpu.memory_space<vmem>>, vector<1x16x640xbf16>
    %3 = vector.shape_cast %2 : vector<1x16x640xbf16> to vector<16x640xbf16>
    %cst = arith.constant dense<0.000000e+00> : vector<8x640xf32>
    %4 = tpu.matmul %1, %3, %cst {dimension_numbers = #tpu.dot_dimension_numbers<[1], [0], [0], [1], [0, 0, 1, 1], [], []>} : vector<8x16xbf16>, vector<16x640xbf16>, vector<8x640xf32> -> vector<8x640xf32>
    %cst_5 = arith.constant dense<0.000000e+00> : vector<8xf32>
    %5 = vector.multi_reduction <add>, %4, %cst_5 [1] : vector<8x640xf32> to vector<8xf32>
    %6 = vector.shape_cast %5 : vector<8xf32> to vector<8x1xf32>
    %c0_6 = arith.constant 0 : index
    %c0_7 = arith.constant 0 : index
    %c0_8 = arith.constant 0 : index
    %c0_9 = arith.constant 0 : index
    %7 = vector.load %arg4[%c0_6, %c0_7, %c0_8, %c0_9] : memref<1x1x8x1xf32, #tpu.memory_space<vmem>>, vector<1x1x8x1xf32>
    %8 = vector.shape_cast %7 : vector<1x1x8x1xf32> to vector<8x1xf32>
    %9 = vector.shape_cast %6 : vector<8x1xf32> to vector<1x1x8x1xf32>
    tpu.vector_store %arg4[%c0_6, %c0_7, %c0_8, %c0_9], %9 {strides = array<i32>} : memref<1x1x8x1xf32, #tpu.memory_space<vmem>>, vector<1x1x8x1xf32>,
    %10 = arith.mulf %4, %4 : vector<8x640xf32>
    %cst_10 = arith.constant dense<0.000000e+00> : vector<8xf32>
    %11 = vector.multi_reduction <add>, %10, %cst_10 [1] : vector<8x640xf32> to vector<8xf32>
    %12 = vector.shape_cast %11 : vector<8xf32> to vector<8x1xf32>
    %c0_11 = arith.constant 0 : index
    %c0_12 = arith.constant 0 : index
    %c0_13 = arith.constant 0 : index
    %c0_14 = arith.constant 0 : index
    %13 = vector.load %arg5[%c0_11, %c0_12, %c0_13, %c0_14] : memref<1x1x8x1xf32, #tpu.memory_space<vmem>>, vector<1x1x8x1xf32>
    %14 = vector.shape_cast %13 : vector<1x1x8x1xf32> to vector<8x1xf32>
    %15 = vector.shape_cast %12 : vector<8x1xf32> to vector<1x1x8x1xf32>
    tpu.vector_store %arg5[%c0_11, %c0_12, %c0_13, %c0_14], %15 {strides = array<i32>} : memref<1x1x8x1xf32, #tpu.memory_space<vmem>>, vector<1x1x8x1xf32>,
    return
  }
  func.func @transform_0(%arg0: i32, %arg1: i32) -> (i32, i32, i32) {
    %c0_i32 = arith.constant 0 : i32
    %c0_i32_0 = arith.constant 0 : i32
    return %arg0, %c0_i32, %arg1 : i32, i32, i32
  }
  func.func @transform_1(%arg0: i32, %arg1: i32) -> (i32, i32, i32) {
    %c0_i32 = arith.constant 0 : i32
    %c0_i32_0 = arith.constant 0 : i32
    %c0_i32_1 = arith.constant 0 : i32
    return %arg0, %c0_i32, %c0_i32_0 : i32, i32, i32
  }
  func.func @transform_2(%arg0: i32, %arg1: i32) -> (i32, i32, i32, i32) {
    %c0_i32 = arith.constant 0 : i32
    %c0_i32_0 = arith.constant 0 : i32
    %c0_i32_1 = arith.constant 0 : i32
    return %arg0, %arg1, %c0_i32, %c0_i32_0 : i32, i32, i32, i32
  }
  func.func @transform_3(%arg0: i32, %arg1: i32) -> (i32, i32, i32, i32) {
    %c0_i32 = arith.constant 0 : i32
    %c0_i32_0 = arith.constant 0 : i32
    %c0_i32_1 = arith.constant 0 : i32
    return %arg0, %arg1, %c0_i32, %c0_i32_0 : i32, i32, i32, i32
  }
}

</mosaic_0001>

<llo_original>
// kernel: tpu_custom_call.1
$region0: #{tpu_custom_call.1}
  #allocation0 [shape = 'u32[]', space=smem, size = 0x4, offset = 0x4, fixed_abs, tag = 'smem constant byte address 0x4 - core index']
  #allocation1 [shape = 'u32[72,128]{1,0:T(1,128)}', space=vmem, size = 0x9000, scoped, tag = 'internal scratch']
  %s0 = inlined_call_operand.hbm [shape: bf16[4,16,640], index: 0, kind: input, shape index: {}]
  %s1 = inlined_call_operand.hbm [shape: bf16[4,8,16], index: 1, kind: input, shape index: {}]
  %s2 = inlined_call_operand.vmem [shape: f32[4,1,8,1], index: 2, kind: output, shape index: {0}]
  %s3 = inlined_call_operand.vmem [shape: f32[4,1,8,1], index: 3, kind: output, shape index: {1}]
  %4 = xla_tuple %s2, %s3
  %s5 = sld [smem:[#allocation0]]
  $region57: #{tpu_custom_call.1} parent=0
    _
  %s7 = ssub.s32 1, %s5
  %s8 = scalar_select 0, %s7, %s5
  $region1: #{tpu_custom_call.1} parent=0
    #allocation2 [shape = 'u8[40960]{0}', space=vmem, size = 0xa000, scoped, tag = 'input window, operand 0']
    #allocation3 [shape = 's32[2]{0}', space=sflag, size = 0x8, scoped, tag = 'scoped memory for tpu_custom_call.1']
    #allocation4 [shape = 'u8[4096]{0}', space=vmem, size = 0x1000, scoped, tag = 'input window, operand 1']
    #allocation5 [shape = 's32[2]{0}', space=sflag, size = 0x8, scoped, tag = 'scoped memory for tpu_custom_call.1']
    %9 = vsyncpa [#allocation3], 0
    %s10 = scalar_lea.sflag [#allocation3], 1
    %11 = vsyncpa %s10, 0
    %12 = vsyncpa [#allocation5], 0
    %s13 = scalar_lea.sflag [#allocation5], 1
    %14 = vsyncpa %s13, 0
    loop: start=0, step=1, limit=6
    $region2: #{tpu_custom_call.1} parent=1 // loop_pre_header
      _
    $region3: #{tpu_custom_call.1} parent=1 // loop_header
      %s16 = sphi 0, %s20
      %p17 = scmp.ge.s32.totalorder %s16, 6
      %s23 = sphi 0, %s35
      %s24 = sphi 0, %s31
      %s25 = sphi 0, %s23
      %s26 = sphi 0, %s24
      %s27 = sphi 0, %s25
      %s28 = sphi 0, %s26
      %s40 = sphi 0, %s42
      %s43 = sphi 0, %s40
      %s44 = sphi 0, %s43
      %s60 = sphi 0, %s44
      %s66 = sphi 0, %s68
      %s69 = sphi 0, %s66
      %s70 = sphi 0, %s69
      %s86 = sphi 0, %s70
      %s94 = sphi 0, %s96
      %s97 = sphi 0, %s94
      %s98 = sphi 0, %s97
      %s114 = sphi 0, %s98
      %s122 = sphi 0, %s124
      %s125 = sphi 0, %s122
      %s126 = sphi 0, %s125
      %s142 = sphi 0, %s126
    $region4: #{tpu_custom_call.1} parent=1 // loop_header_branch
      %19 = sbr.rel (%p17) target = $region8
    $region5: #{tpu_custom_call.1} parent=1 // loop_body
      %s21 = ssub.s32 %s16, 1
      %s22 = ssub.s32 %s16, 2
      %s29 = sadd.s32 1, %s24
      %p30 = scmp.ge.s32.totalorder %s29, 1
      %s31 = scalar_select %p30, 0, %s29
      %s32 = sadd.s32 1, %s23
      %s33 = scalar_select %p30, %s32, %s23
      %p34 = scmp.ge.s32.totalorder %s33, 4
      %s35 = scalar_select %p34, 0, %s33
      %s36 = ssub.s32 %s23, %s35
      %s37 = ssub.s32 %s24, %s31
      %s38 = sor.u32 %s36, %s37
      %p39 = scmp.eq.s32.totalorder %s38, 0
      %s41 = sadd.s32 %s40, 1
      %s42 = scalar_select %p39, %s40, %s41
      %p45 = pneg %p39
      %p46 = scmp.eq.s32.totalorder %s16, 3
      %p47 = por %p45, %p46
      %p48 = scmp.ne.s32.totalorder %s40, %s43
      %p49 = scmp.eq.s32.totalorder %s16, 0
      %p50 = por %p48, %p49
      %p51 = scmp.ne.s32.totalorder %s40, %s43
      %p52 = scmp.eq.s32.totalorder %s21, 3
      %p53 = por %p51, %p52
      %p54 = scmp.ne.s32.totalorder %s43, %s44
      %p55 = scmp.eq.s32.totalorder %s21, 0
      %p56 = por %p54, %p55
      %p57 = scmp.ne.s32.totalorder %s43, %s44
      %p58 = scmp.eq.s32.totalorder %s22, 3
      %p59 = por %p57, %p58
      %p61 = scmp.ne.s32.totalorder %s44, %s60
      %p62 = scmp.eq.s32.totalorder %s22, 0
      %p63 = por %p61, %p62
      %s64 = ssub.s32 %s23, %s35
      %p65 = scmp.eq.s32.totalorder %s64, 0
      %s67 = sadd.s32 %s66, 1
      %s68 = scalar_select %p65, %s66, %s67
      %p71 = pneg %p65
      %p72 = scmp.eq.s32.totalorder %s16, 3
      %p73 = por %p71, %p72
      %p74 = scmp.ne.s32.totalorder %s66, %s69
      %p75 = scmp.eq.s32.totalorder %s16, 0
      %p76 = por %p74, %p75
      %p77 = scmp.ne.s32.totalorder %s66, %s69
      %p78 = scmp.eq.s32.totalorder %s21, 3
      %p79 = por %p77, %p78
      %p80 = scmp.ne.s32.totalorder %s69, %s70
      %p81 = scmp.eq.s32.totalorder %s21, 0
      %p82 = por %p80, %p81
      %p83 = scmp.ne.s32.totalorder %s69, %s70
      %p84 = scmp.eq.s32.totalorder %s22, 3
      %p85 = por %p83, %p84
      %p87 = scmp.ne.s32.totalorder %s70, %s86
      %p88 = scmp.eq.s32.totalorder %s22, 0
      %p89 = por %p87, %p88
      %s90 = ssub.s32 %s23, %s35
      %s91 = ssub.s32 %s24, %s31
      %s92 = sor.u32 %s90, %s91
      %p93 = scmp.eq.s32.totalorder %s92, 0
      %s95 = sadd.s32 %s94, 1
      %s96 = scalar_select %p93, %s94, %s95
      %p99 = pneg %p93
      %p100 = scmp.eq.s32.totalorder %s16, 3
      %p101 = por %p99, %p100
      %p102 = scmp.ne.s32.totalorder %s94, %s97
      %p103 = scmp.eq.s32.totalorder %s16, 0
      %p104 = por %p102, %p103
      %p105 = scmp.ne.s32.totalorder %s94, %s97
      %p106 = scmp.eq.s32.totalorder %s21, 3
      %p107 = por %p105, %p106
      %p108 = scmp.ne.s32.totalorder %s97, %s98
      %p109 = scmp.eq.s32.totalorder %s21, 0
      %p110 = por %p108, %p109
      %p111 = scmp.ne.s32.totalorder %s97, %s98
      %p112 = scmp.eq.s32.totalorder %s22, 3
      %p113 = por %p111, %p112
      %p115 = scmp.ne.s32.totalorder %s98, %s114
      %p116 = scmp.eq.s32.totalorder %s22, 0
      %p117 = por %p115, %p116
      %s118 = ssub.s32 %s23, %s35
      %s119 = ssub.s32 %s24, %s31
      %s120 = sor.u32 %s118, %s119
      %p121 = scmp.eq.s32.totalorder %s120, 0
      %s123 = sadd.s32 %s122, 1
      %s124 = scalar_select %p121, %s122, %s123
      %p127 = pneg %p121
      %p128 = scmp.eq.s32.totalorder %s16, 3
      %p129 = por %p127, %p128
      %p130 = scmp.ne.s32.totalorder %s122, %s125
      %p131 = scmp.eq.s32.totalorder %s16, 0
      %p132 = por %p130, %p131
      %p133 = scmp.ne.s32.totalorder %s122, %s125
      %p134 = scmp.eq.s32.totalorder %s21, 3
      %p135 = por %p133, %p134
      %p136 = scmp.ne.s32.totalorder %s125, %s126
      %p137 = scmp.eq.s32.totalorder %s21, 0
      %p138 = por %p136, %p137
      %p139 = scmp.ne.s32.totalorder %s125, %s126
      %p140 = scmp.eq.s32.totalorder %s22, 3
      %p141 = por %p139, %p140
      %p143 = scmp.ne.s32.totalorder %s126, %s142
      %p144 = scmp.eq.s32.totalorder %s22, 0
      %p145 = por %p143, %p144
      %p146 = scmp.le.s32.totalorder 1, %s16
      %p147 = scmp.lt.s32.totalorder %s16, 5
      %p148 = pnand %p146, %p147
      %p149 = pneg %p148
      // Predicated region
      $region9: #{tpu_custom_call.1} parent=5 // pred_check
        _
      $region10: #{tpu_custom_call.1} parent=5 // pred_check_branch
        %151 = sbr.rel (%p148) target = $region12
      $region11: #{tpu_custom_call.1} parent=5 // pred_region
        %s152 = ssub.s32 %s16, 1
      $region12: #{tpu_custom_call.1} parent=5 // pred_fallthru
        _
      %p153 = scmp.lt.s32.totalorder %s16, 4
      // Predicated region
      $region13: #{tpu_custom_call.1} parent=5 // pred_check
        %p154 = pneg %p153
      $region14: #{tpu_custom_call.1} parent=5 // pred_check_branch
        %156 = sbr.rel (%p154) target = $region16
      $region15: #{tpu_custom_call.1} parent=5 // pred_region
        // Predicated region
        $region17: #{tpu_custom_call.1} parent=15 // pred_check
          %p157 = pneg %p50
        $region18: #{tpu_custom_call.1} parent=15 // pred_check_branch
          %159 = sbr.rel (%p157) target = $region20
        $region19: #{tpu_custom_call.1} parent=15 // pred_region
          %s160 = sand.u32 %s40, 1
          %s161 = scalar_lea.sflag [#allocation3], %s160
          %s162 = sand.u32 %s40, 1
          %s163 = smul.addr %s162, 40
          %s164 = scalar_lea.vmem [#allocation2], %s163
          %s165 = smul.u32 5, %s24
          %167 = vsyncadd %s161, 0
          %s168 = smul.addr %s23, 10
          %s169 = sadd.s32 %s165, %s168
          %s170 = smul.addr %s169, 4
          %s171 = scalar_lea.hbm %s0, %s170
          %s172 = sshll.u32 %s171, 4
          %s173 = int_to_ptr.hbm [resolvable:$true] %s172
          %s174 = sshll.u32 %s164, 4
          %s175 = int_to_ptr.vmem [resolvable:$true] %s174
          %180 = dma.hbm_to_vmem [thread:$0]  %s173, 640, %s175, %s161, 320, 320, 20
        $region20: #{tpu_custom_call.1} parent=15 // pred_fallthru
          _
        // Predicated region
        $region21: #{tpu_custom_call.1} parent=15 // pred_check
          %p181 = pneg %p76
        $region22: #{tpu_custom_call.1} parent=15 // pred_check_branch
          %183 = sbr.rel (%p181) target = $region24
        $region23: #{tpu_custom_call.1} parent=15 // pred_region
          %s184 = sand.u32 %s66, 1
          %s185 = scalar_lea.sflag [#allocation5], %s184
          %s186 = sand.u32 %s66, 1
          %s187 = smul.addr %s186, 4
          %s188 = scalar_lea.vmem [#allocation4], %s187
          %190 = vsyncadd %s185, 0
          %s191 = smul.addr %s23, 4
          %s192 = scalar_lea.hbm %s1, %s191
          %s194 = sshll.u32 %s192, 4
          %s195 = int_to_ptr.hbm [resolvable:$true] %s194
          %s196 = sshll.u32 %s188, 4
          %s197 = int_to_ptr.vmem [resolvable:$true] %s196
          %199 = dma.hbm_to_vmem [thread:$0]  %s195, 64, %s197, %s185
        $region24: #{tpu_custom_call.1} parent=15 // pred_fallthru
          _
      $region16: #{tpu_custom_call.1} parent=5 // pred_fallthru
        _
      %p200 = scmp.le.s32.totalorder 1, %s16
      %p201 = scmp.lt.s32.totalorder %s16, 5
      %p202 = pnand %p200, %p201
      %p203 = pneg %p202
      // Predicated region
      $region25: #{tpu_custom_call.1} parent=5 // pred_check
        _
      $region26: #{tpu_custom_call.1} parent=5 // pred_check_branch
        %205 = sbr.rel (%p202) target = $region28
      $region27: #{tpu_custom_call.1} parent=5 // pred_region
        %s206 = ssub.s32 %s16, 1
        %s207 = sand.u32 %s43, 1
        %s208 = scalar_lea.sflag [#allocation3], %s207
        %s209 = sand.u32 %s43, 1
        %s210 = smul.addr %s209, 40
        %s211 = scalar_lea.vmem [#allocation2], %s210
        // Predicated region
        $region29: #{tpu_custom_call.1} parent=27 // pred_check
          %p212 = pneg %p56
        $region30: #{tpu_custom_call.1} parent=27 // pred_check_branch
          %214 = sbr.rel (%p212) target = $region32
        $region31: #{tpu_custom_call.1} parent=27 // pred_region
          %216 = dma.done %s208, 640
        $region32: #{tpu_custom_call.1} parent=27 // pred_fallthru
          _
        %s217 = sand.u32 %s69, 1
        %s218 = scalar_lea.sflag [#allocation5], %s217
        %s219 = sand.u32 %s69, 1
        %s220 = smul.addr %s219, 4
        %s221 = scalar_lea.vmem [#allocation4], %s220
        // Predicated region
        $region33: #{tpu_custom_call.1} parent=27 // pred_check
          %p222 = pneg %p82
        $region34: #{tpu_custom_call.1} parent=27 // pred_check_branch
          %224 = sbr.rel (%p222) target = $region36
        $region35: #{tpu_custom_call.1} parent=27 // pred_region
          %226 = dma.done %s218, 64
        $region36: #{tpu_custom_call.1} parent=27 // pred_fallthru
          _
        %s227 = sand.u32 %s43, 1
        %s228 = scalar_lea.sflag [#allocation3], %s227
        %s229 = sand.u32 %s43, 1
        %s230 = smul.addr %s229, 40
        %s231 = scalar_lea.vmem [#allocation2], %s230
        %p232 = pneg %p56
        %p233 = pneg %p53
        %s234 = sand.u32 %s69, 1
        %s235 = scalar_lea.sflag [#allocation5], %s234
        %s236 = sand.u32 %s69, 1
        %s237 = smul.addr %s236, 4
        %s238 = scalar_lea.vmem [#allocation4], %s237
        %p239 = pneg %p82
        %p240 = pneg %p79
        %p241 = pneg %p110
        %p242 = pneg %p107
        %p243 = scmp.lt.s32.totalorder %s25, 3
        %s244 = scalar_select %p243, %s25, 3
        %p245 = scmp.lt.s32.totalorder %s26, 0
        %s246 = scalar_select %p245, %s26, 0
        %s247 = sadd.s32 %s246, %s244
        %s248 = smul.addr %s247, 8
        %s249 = scalar_lea.vmem %s2, %s248
        %p250 = pneg %p138
        %p251 = pneg %p135
        %p252 = scmp.lt.s32.totalorder %s25, 3
        %s253 = scalar_select %p252, %s25, 3
        %p254 = scmp.lt.s32.totalorder %s26, 0
        %s255 = scalar_select %p254, %s26, 0
        %s256 = sadd.s32 %s255, %s253
        %s257 = smul.addr %s256, 8
        %s258 = scalar_lea.vmem %s3, %s257
        %s259 = smul.u32 5, %s26
        %p260 = scmp.lt.s32.totalorder %s25, 3
        %s261 = scalar_select %p260, %s25, 3
        %p262 = scmp.lt.s32.totalorder %s26, 0
        %s263 = scalar_select %p262, %s26, 0
        %s264 = sadd.s32 %s263, %s261
        %s265 = smul.addr %s264, 8
        %s266 = scalar_lea.vmem %s2, %s265
        %p267 = scmp.lt.s32.totalorder %s25, 3
        %s268 = scalar_select %p267, %s25, 3
        %p269 = scmp.lt.s32.totalorder %s26, 0
        %s270 = scalar_select %p269, %s26, 0
        %s271 = sadd.s32 %s270, %s268
        %s272 = smul.addr %s271, 8
        %s273 = scalar_lea.vmem %s3, %s272
        %v275 = vld [vmem:[%s221] sm:$0xf]
        %v276 = vld [vmem:[%s211] sm:$0xff]
        %v277 = vld [vmem:[%s211 + $0x8] sm:$0xff]
        %v278 = vld [vmem:[%s211 + $0x10] sm:$0xf]
        %v279 = vld [vmem:[%s211 + $0x14] sm:$0xff]
        %v280 = vld [vmem:[%s211 + $0x1c] sm:$0xff]
        %v281 = vld [vmem:[%s211 + $0x24] sm:$0xf]
        %v288 = vunpack.c.l.b16 %v276
        %v289 = vunpack.c.h.b16 %v276
        %v290 = vunpack.c.l.b16 %v277
        %v291 = vunpack.c.h.b16 %v277
        %v292 = vunpack.c.l.b16 %v278
        %v293 = vunpack.c.l.b16 %v279
        %v294 = vunpack.c.h.b16 %v279
        %v295 = vunpack.c.l.b16 %v280
        %v296 = vunpack.c.h.b16 %v280
        %v297 = vunpack.c.l.b16 %v281
        %v298 = vpack.c.b16 %v293, %v288
        %v299 = vpack.c.b16 %v294, %v289
        %v300 = vpack.c.b16 %v295, %v290
        %v301 = vpack.c.b16 %v296, %v291
        %v302 = vpack.c.b16 %v297, %v292
        %vm308 = vcmask 130048
        %v310 = vsel %vm308, %v275, 0
        %312 = vmatpush.bf16.msra.mxu0 0
        %313 = vmatpush.bf16.msra.mxu0 0
        %314 = vmatpush.bf16.msra.mxu0 0
        %315 = vmatpush.bf16.msra.mxu0 0
        %316 = vmatpush.bf16.msra.mxu0 0
        %317 = vmatpush.bf16.msra.mxu0 0
        %318 = vmatpush.bf16.msra.mxu0 0
        %319 = vmatpush.bf16.msra.mxu0 %v298
        %320 = vmatmul.bf16.gmra.mxu0 %v310
        %v321 = vpop.f32.mrf.mxu0
        %v322 = vadd.f32 0.0, %v321
        %v323 = vpop.f32.mrf.mxu0
        %324 = vdwg.mxu0
        %325 = vmatpush.bf16.msra.mxu0 0
        %326 = vmatpush.bf16.msra.mxu0 0
        %327 = vmatpush.bf16.msra.mxu0 0
        %328 = vmatpush.bf16.msra.mxu0 0
        %329 = vmatpush.bf16.msra.mxu0 0
        %330 = vmatpush.bf16.msra.mxu0 0
        %331 = vmatpush.bf16.msra.mxu0 0
        %332 = vmatpush.bf16.msra.mxu0 %v299
        %333 = vmatmul.bf16.gmra.mxu0 %v310
        %v334 = vpop.f32.mrf.mxu0
        %v335 = vadd.f32 0.0, %v334
        %v336 = vpop.f32.mrf.mxu0
        %337 = vdwg.mxu0
        %338 = vmatpush.bf16.msra.mxu0 0
        %339 = vmatpush.bf16.msra.mxu0 0
        %340 = vmatpush.bf16.msra.mxu0 0
        %341 = vmatpush.bf16.msra.mxu0 0
        %342 = vmatpush.bf16.msra.mxu0 0
        %343 = vmatpush.bf16.msra.mxu0 0
        %344 = vmatpush.bf16.msra.mxu0 0
        %345 = vmatpush.bf16.msra.mxu0 %v300
        %346 = vmatmul.bf16.gmra.mxu0 %v310
        %v347 = vpop.f32.mrf.mxu0
        %v348 = vadd.f32 0.0, %v347
        %v349 = vpop.f32.mrf.mxu0
        %350 = vdwg.mxu0
        %351 = vmatpush.bf16.msra.mxu0 0
        %352 = vmatpush.bf16.msra.mxu0 0
        %353 = vmatpush.bf16.msra.mxu0 0
        %354 = vmatpush.bf16.msra.mxu0 0
        %355 = vmatpush.bf16.msra.mxu0 0
        %356 = vmatpush.bf16.msra.mxu0 0
        %357 = vmatpush.bf16.msra.mxu0 0
        %358 = vmatpush.bf16.msra.mxu0 %v301
        %359 = vmatmul.bf16.gmra.mxu0 %v310
        %v360 = vpop.f32.mrf.mxu0
        %v361 = vadd.f32 0.0, %v360
        %v362 = vpop.f32.mrf.mxu0
        %363 = vdwg.mxu0
        %364 = vmatpush.bf16.msra.mxu0 0
        %365 = vmatpush.bf16.msra.mxu0 0
        %366 = vmatpush.bf16.msra.mxu0 0
        %367 = vmatpush.bf16.msra.mxu0 0
        %368 = vmatpush.bf16.msra.mxu0 0
        %369 = vmatpush.bf16.msra.mxu0 0
        %370 = vmatpush.bf16.msra.mxu0 0
        %371 = vmatpush.bf16.msra.mxu0 %v302
        %372 = vmatmul.bf16.gmra.mxu0 %v310
        %v373 = vpop.f32.mrf.mxu0
        %v374 = vadd.f32 0.0, %v373
        %v375 = vpop.f32.mrf.mxu0
        %376 = vdwg.mxu0
        %v377 = vadd.f32 %v322, %v335
        %v378 = vadd.f32 %v377, %v348
        %v379 = vadd.f32 %v378, %v361
        %v380 = vadd.f32 %v379, %v374
        %381 = vadd.xlane.f32.xlu0 %v380
        %v382 = vpop.xlane.xlu0 %381
        %vm383 = vcmask 7168
        %384 = vst.msk [vmem:[%s266] sm:$0xff] %vm383, %v382
        %v385 = vmul.f32 %v322, %v322
        %v386 = vmul.f32 %v335, %v335
        %v387 = vmul.f32 %v348, %v348
        %v388 = vmul.f32 %v361, %v361
        %v389 = vmul.f32 %v374, %v374
        %v390 = vadd.f32 %v385, %v386
        %v391 = vadd.f32 %v390, %v387
        %v392 = vadd.f32 %v391, %v388
        %v393 = vadd.f32 %v392, %v389
        %394 = vadd.xlane.f32.xlu0 %v393
        %v395 = vpop.xlane.xlu0 %394
        %396 = vst.msk [vmem:[%s273] sm:$0xff] %vm383, %v395
        %p397 = scmp.lt.s32.totalorder %s25, 3
        %s398 = scalar_select %p397, %s25, 3
        %p399 = scmp.lt.s32.totalorder %s26, 0
        %s400 = scalar_select %p399, %s26, 0
        %s401 = sadd.s32 %s400, %s398
        %s402 = smul.addr %s401, 8
        %s403 = scalar_lea.vmem %s2, %s402
        %p404 = scmp.lt.s32.totalorder %s25, 3
        %s405 = scalar_select %p404, %s25, 3
        %p406 = scmp.lt.s32.totalorder %s26, 0
        %s407 = scalar_select %p406, %s26, 0
        %s408 = sadd.s32 %s407, %s405
        %s409 = smul.addr %s408, 8
        %s410 = scalar_lea.vmem %s3, %s409
        // Predicated region
        $region37: #{tpu_custom_call.1} parent=27 // pred_check
          %p411 = pneg %p107
        $region38: #{tpu_custom_call.1} parent=27 // pred_check_branch
          %413 = sbr.rel (%p411) target = $region40
        $region39: #{tpu_custom_call.1} parent=27 // pred_region
          _
        $region40: #{tpu_custom_call.1} parent=27 // pred_fallthru
          _
        // Predicated region
        $region41: #{tpu_custom_call.1} parent=27 // pred_check
          %p414 = pneg %p135
        $region42: #{tpu_custom_call.1} parent=27 // pred_check_branch
          %416 = sbr.rel (%p414) target = $region44
        $region43: #{tpu_custom_call.1} parent=27 // pred_region
          _
        $region44: #{tpu_custom_call.1} parent=27 // pred_fallthru
          _
      $region28: #{tpu_custom_call.1} parent=5 // pred_fallthru
        _
      %p417 = scmp.le.s32.totalorder 2, %s16
      // Predicated region
      $region45: #{tpu_custom_call.1} parent=5 // pred_check
        %p418 = pneg %p417
      $region46: #{tpu_custom_call.1} parent=5 // pred_check_branch
        %420 = sbr.rel (%p418) target = $region48
      $region47: #{tpu_custom_call.1} parent=5 // pred_region
        %s421 = ssub.s32 %s16, 2
        // Predicated region
        $region49: #{tpu_custom_call.1} parent=47 // pred_check
          %p422 = pneg %p113
        $region50: #{tpu_custom_call.1} parent=47 // pred_check_branch
          %424 = sbr.rel (%p422) target = $region52
        $region51: #{tpu_custom_call.1} parent=47 // pred_region
          %p425 = scmp.lt.s32.totalorder %s27, 3
          %s426 = scalar_select %p425, %s27, 3
          %p427 = scmp.lt.s32.totalorder %s28, 0
          %s428 = scalar_select %p427, %s28, 0
          %s429 = sadd.s32 %s428, %s426
          %s430 = smul.addr %s429, 8
          %s431 = scalar_lea.vmem %s2, %s430
        $region52: #{tpu_custom_call.1} parent=47 // pred_fallthru
          _
        // Predicated region
        $region53: #{tpu_custom_call.1} parent=47 // pred_check
          %p432 = pneg %p141
        $region54: #{tpu_custom_call.1} parent=47 // pred_check_branch
          %434 = sbr.rel (%p432) target = $region56
        $region55: #{tpu_custom_call.1} parent=47 // pred_region
          %p435 = scmp.lt.s32.totalorder %s27, 3
          %s436 = scalar_select %p435, %s27, 3
          %p437 = scmp.lt.s32.totalorder %s28, 0
          %s438 = scalar_select %p437, %s28, 0
          %s439 = sadd.s32 %s438, %s436
          %s440 = smul.addr %s439, 8
          %s441 = scalar_lea.vmem %s3, %s440
        $region56: #{tpu_custom_call.1} parent=47 // pred_fallthru
          _
      $region48: #{tpu_custom_call.1} parent=5 // pred_fallthru
        _
    $region6: #{tpu_custom_call.1} parent=1 // loop_footer
      %s20 = sadd.s32 1, %s16
    $region7: #{tpu_custom_call.1} parent=1 // loop_footer_branch
      %15 = sbr.rel target = $region3
    $region8: #{tpu_custom_call.1} parent=1 // loop_exit
      _
    %442 = vsyncpa [#allocation3], 1
    %s443 = scalar_lea.sflag [#allocation3], 1
    %444 = vsyncpa %s443, 1
    %445 = vsyncpa [#allocation5], 1
    %s446 = scalar_lea.sflag [#allocation5], 1
    %447 = vsyncpa %s446, 1

</llo_original>
